<compile_context>
chip_gen: v5e
topology: v5e:2x2
jax: 0.10.0
libtpu: 0.0.40
codegen_flags: <defaults>
</compile_context>

<pallas_src>
import functools

import jax
import jax.numpy as jnp
from jax.experimental import pallas as pl
from jax.experimental.pallas import tpu as pltpu


_SQRT_2_OVER_PI = 0.7978845608028654  # sqrt(2/pi)
_GELU_C = 0.044715

# Per-row-tile budget for the (tm, h_chunk) f32 + bf16 intermediates; below
# this we do NOT chunk the hidden dimension (GPT-2 tm=512, H=3072 is ~9 MiB).
_INTERM_BUDGET_BYTES = 16 << 20


def _round_up(n, m):
    return ((n + m - 1) // m) * m


def _vmem_capacity_bytes():
    """Physical per-TensorCore VMEM; conservative (v7x = 64 MiB) if unknown."""
    try:
        return int(pltpu.get_tpu_info().vmem_capacity_bytes)
    except Exception:
        return 64 << 20


def _pick_h_chunk(tm, H):
    """H-chunk so (tm, h_chunk) f32+bf16 intermediates fit the budget.

    Returns H (no chunking) for every GPT-2-scale configuration; only very
    wide MLPs / very tall tiles fall back to a 128-aligned divisor of H.
    """
    def interm_bytes(hc):
        return tm * hc * (4 + 2)      # h (f32) + g (bf16)

    if interm_bytes(H) <= _INTERM_BUDGET_BYTES or H <= 128:
        return H
    best = None
    for hc in range(128, H, 128):
        if H % hc == 0 and interm_bytes(hc) <= _INTERM_BUDGET_BYTES:
            best = hc
    return best if best is not None else H


def _vmem_limit_bytes(tm, E, H, h_chunk, *, weights_single_buffered):
    w_mult = 1 if weights_single_buffered else 2
    w_bytes = w_mult * 2 * E * H * 2          # W1 + W2, bf16, resident blocks
    b_bytes = w_mult * (H + E) * 4            # biases, f32
    io_bytes = 2 * 2 * tm * E * 4             # x + out tiles, double-buffered
    interm = tm * h_chunk * (4 + 2)           # h (f32) + g (bf16)
    acc = tm * E * 4 if h_chunk != H else 0   # VMEM accumulator (chunked only)
    need = int((w_bytes + b_bytes + io_bytes + interm + acc) * 1.4) + (2 << 20)
    # Leave headroom for Mosaic internal scratch: cap at 3/4 of physical VMEM
    # (=> ~48 MiB on v7x, ~96 MiB on v5e/v6e); never below the 32 MiB default.
    cap = _vmem_capacity_bytes() * 3 // 4
    return max(32 << 20, min(need, cap))


# ---------------------------------------------------------------------------
# Kernels
# ---------------------------------------------------------------------------

def _gelu_tanh_f32(h):
    c0 = jnp.float32(_SQRT_2_OVER_PI)
    c1 = jnp.float32(_GELU_C)
    # GPT-2 tanh-approximation GeLU, f32, explicit h*h*h (cheaper than pow).
    return 0.5 * h * (1.0 + jnp.tanh(c0 * (h + c1 * (h * h * h))))


def _mlp_kernel_fused(x_ref, w1_ref, b1_ref, w2_ref, b2_ref, o_ref):
    """Single-shot: x@W1 + b1 -> GeLU -> g@W2 + b2, per row tile."""
    x_bf = x_ref[...].astype(jnp.bfloat16)
    h = jnp.dot(x_bf, w1_ref[...], preferred_element_type=jnp.float32)
    h = h + b1_ref[...]
    g = _gelu_tanh_f32(h)
    out = jnp.dot(g.astype(jnp.bfloat16), w2_ref[...],
                  preferred_element_type=jnp.float32) + b2_ref[...]
    o_ref[...] = out.astype(o_ref.dtype)


def _mlp_kernel_chunked(x_ref, w1_ref, b1_ref, w2_ref, b2_ref, o_ref, acc_ref,
                        *, h_chunk):
    """Fallback for very wide MLPs: chunk H, accumulate in a VMEM scratch."""
    tm, E = o_ref.shape
    H = w1_ref.shape[1]
    n_chunks = H // h_chunk

    x_bf = x_ref[...].astype(jnp.bfloat16)
    # Fold the second bias into the accumulator init.
    acc_ref[...] = jnp.broadcast_to(b2_ref[...], (tm, E)).astype(jnp.float32)

    for c in range(n_chunks):
        lo = c * h_chunk
        h = jnp.dot(x_bf, w1_ref[:, lo:lo + h_chunk],
                    preferred_element_type=jnp.float32)
        h = h + b1_ref[:, lo:lo + h_chunk]
        g = _gelu_tanh_f32(h)
        acc_ref[...] += jnp.dot(g.astype(jnp.bfloat16),
                                w2_ref[lo:lo + h_chunk, :],
                                preferred_element_type=jnp.float32)

    o_ref[...] = acc_ref[...].astype(o_ref.dtype)


# ---------------------------------------------------------------------------
# Buffered(1) capability probe (one-off, narrow; the real call is NOT wrapped
# in a broad except, so genuine lowering errors fail loudly).
# ---------------------------------------------------------------------------

_BUFFERED_ONE_OK = None


def _buffered_one_supported():
    global _BUFFERED_ONE_OK
    if _BUFFERED_ONE_OK is not None:
        return _BUFFERED_ONE_OK

    def _copy(x_ref, o_ref):
        o_ref[...] = x_ref[...]

    try:
        probe = pl.pallas_call(
            _copy,
            out_shape=jax.ShapeDtypeStruct((16, 128), jnp.float32),
            grid_spec=pltpu.PrefetchScalarGridSpec(
                num_scalar_prefetch=0,
                grid=(2,),
                in_specs=[pl.BlockSpec((8, 128), lambda i: (0, 0),
                                       pipeline_mode=pl.Buffered(1))],
                out_specs=pl.BlockSpec((8, 128), lambda i: (i, 0)),
            ),
        )
        jax.jit(probe).lower(
            jax.ShapeDtypeStruct((8, 128), jnp.float32)).compile()
        _BUFFERED_ONE_OK = True
    except Exception:
        print("WARNING: pl.Buffered(1) unsupported on this JAX/Mosaic build; "
              "grid-invariant weight blocks will be double-buffered "
              "(2x resident-weight VMEM; tight on v7x for wide MLPs).")
        _BUFFERED_ONE_OK = False
    return _BUFFERED_ONE_OK


# ---------------------------------------------------------------------------
# pallas_call builder + wrapper
# ---------------------------------------------------------------------------

def _build_call(kernel, M_pad, E, H, tm, out_dtype, vmem_limit, *,
                weights_single_buffered, scratch_shapes=()):
    # Grid-invariant weight/bias blocks: resident, never re-fetched across the
    # row-tile axis (re-fetching ~9 MiB of bf16 weights per tile would flip
    # the kernel memory-bound on v5e).  Single-buffer them when supported.
    wkw = dict(pipeline_mode=pl.Buffered(1)) if weights_single_buffered else {}

    cost = pl.CostEstimate(
        flops=4 * M_pad * E * H,                       # two matmuls
        transcendentals=M_pad * H,                     # one tanh per hidden elt
        bytes_accessed=2 * E * H * 2 + (H + E) * 4 + 2 * M_pad * E * 4,
    )

    return pl.pallas_call(
        kernel,
        out_shape=jax.ShapeDtypeStruct((M_pad, E), out_dtype),
        grid_spec=pltpu.PrefetchScalarGridSpec(
            num_scalar_prefetch=0,
            grid=(M_pad // tm,),
            in_specs=[
                pl.BlockSpec((tm, E), lambda i: (i, 0)),         # x rows (pipelined)
                pl.BlockSpec((E, H), lambda i: (0, 0), **wkw),   # W1 (resident, bf16)
                pl.BlockSpec((1, H), lambda i: (0, 0), **wkw),   # b1 (f32)
                pl.BlockSpec((H, E), lambda i: (0, 0), **wkw),   # W2 (resident, bf16)
                pl.BlockSpec((1, E), lambda i: (0, 0), **wkw),   # b2 (f32)
            ],
            out_specs=pl.BlockSpec((tm, E), lambda i: (i, 0)),
            scratch_shapes=list(scratch_shapes),
        ),
        compiler_params=pltpu.CompilerParams(
            dimension_semantics=("parallel",),
            vmem_limit_bytes=vmem_limit,
        ),
        cost_estimate=cost,
    )


def prepare_mlp_params(w1, b1, w2, b2):
    """One-time parameter prep (call at load time, NOT per forward).

    Converts the MXU operands to bf16 and reshapes biases to row vectors so
    the per-step path has no extra f32->bf16 HBM pass in front of the kernel.
    """
    E, H = w1.shape
    return (w1.astype(jnp.bfloat16),
            b1.reshape(1, H).astype(jnp.float32),
            w2.astype(jnp.bfloat16),
            b2.reshape(1, E).astype(jnpp_float32) if False else
            b2.reshape(1, E).astype(jnp.float32))


def mlp_forward(x, w1_bf, b1_2d, w2_bf, b2_2d, *, tm_target=512):
    """x: (B, T, E) float32; params from prepare_mlp_params. Returns (B, T, E)."""
    B, T, E = x.shape
    H = w1_bf.shape[1]
    M = B * T

    # Defensive: accept unprepared params without adding a per-call cast when
    # they are already bf16/f32 row vectors.
    if w1_bf.dtype != jnp.bfloat16:
        w1_bf = w1_bf.astype(jnp.bfloat16)
    if w2_bf.dtype != jnp.bfloat16:
        w2_bf = w2_bf.astype(jnp.bfloat16)
    b1_2d = jnp.asarray(b1_2d, jnp.float32).reshape(1, H)
    b2_2d = jnp.asarray(b2_2d, jnp.float32).reshape(1, E)

    # Row tile: as large as possible up to tm_target (multiple of 8 sublanes);
    # shrink only if the grid would collapse to 1-2 steps.
    tm = _round_up(min(tm_target, _round_up(M, 8)), 8)
    while tm > 8 and pl.cdiv(M, tm) < 4:
        tm = _round_up(max(8, tm // 2), 8)

    # Pad M to a tile multiple; keep the step count EVEN when >1 so v7x's two
    # TensorCores split the "parallel" axis evenly.  Padded rows compute
    # gelu(b1)@W2 + b2 garbage that is sliced off below -- never read.
    M_pad = _round_up(M, tm)
    n_tiles = M_pad // tm
    if n_tiles > 1 and n_tiles % 2 != 0:
        M_pad = _round_up(M_pad, 2 * tm)

    x2d = x.reshape(M, E)
    if M_pad != M:
        x2d = jnp.pad(x2d, ((0, M_pad - M), (0, 0)))

    single_buf = _buffered_one_supported()
    h_chunk = _pick_h_chunk(tm, H)
    vmem_limit = _vmem_limit_bytes(tm, E, H, h_chunk,
                                   weights_single_buffered=single_buf)

    if h_chunk == H:
        kernel = _mlp_kernel_fused
        scratch = ()
    else:
        kernel = functools.partial(_mlp_kernel_chunked, h_chunk=h_chunk)
        scratch = (pltpu.VMEM((tm, E), jnp.float32),)

    out2d = _build_call(kernel, M_pad, E, H, tm, x.dtype, vmem_limit,
                        weights_single_buffered=single_buf,
                        scratch_shapes=scratch)(x2d, w1_bf, b1_2d, w2_bf, b2_2d)

    # NOTE: for the toy E=32 config the output block is lane-sparse (<128);
    # real GPT-2 (E=768) gives lane-dense, unmasked stores automatically.
    return out2d[:M].reshape(B, T, E)


def reference_mlp(x, w1, b1, w2, b2):
    h = jnp.einsum("bte,eh->bth", x, w1) + b1
    c = 0.5 * h * (1.0 + jnp.tanh(
        jnp.float32(_SQRT_2_OVER_PI) * (h + _GELU_C * (h ** 3))))
    return jnp.einsum("bth,he->bte", c, w2) + b2


if __name__ == "__main__":
    # Small, GPT-2-like config: emb_dim=32 -> hidden=128
    B, T, E = 2, 8, 32
    H = 4 * E

    key = jax.random.PRNGKey(0)
    kx, k1, kb1, k2, kb2 = jax.random.split(key, 5)

    x = jax.random.normal(kx, (B, T, E), dtype=jnp.float32)
    # Deterministic synthetic parameters (not a checkpoint load).
    w1 = jax.random.normal(k1, (E, H), dtype=jnp.float32) * 0.02
    b1 = jax.random.normal(kb1, (H,), dtype=jnp.float32) * 0.02
    w2 = jax.random.normal(k2, (H, E), dtype=jnp.float32) * 0.02
    b2 = jax.random.normal(kb2, (E,), dtype=jnp.float32) * 0.02

    # One-time param prep (bf16 MXU weights, f32 biases) outside the hot path.
    w1_bf, b1_2d, w2_bf, b2_2d = prepare_mlp_params(w1, b1, w2, b2)

    out = mlp_forward(x, w1_bf, b1_2d, w2_bf, b2_2d)
    out = jax.block_until_ready(out)

    ref = reference_mlp(x, w1, b1, w2, b2)
    assert out.shape == (B, T, E)
    # bf16 MXU operands with f32 accumulation -> loosened tolerance vs the
    # pure-f32 reference (deliberate precision tradeoff, not a bug).
    assert jnp.allclose(out, ref, atol=2e-2, rtol=2e-2), (
        float(jnp.max(jnp.abs(out - ref))))

    print("KERNEL_OK")
</pallas_src>

<mosaic_0001>
module attributes {stable_mosaic.version = 11 : i64} {
  func.func @_mlp_kernel_fused(%arg0: i32, %arg1: memref<8x32xf32, #tpu.memory_space<vmem>>, %arg2: memref<32x128xbf16, #tpu.memory_space<vmem>>, %arg3: memref<1x128xf32, #tpu.memory_space<vmem>>, %arg4: memref<128x32xbf16, #tpu.memory_space<vmem>>, %arg5: memref<1x32xf32, #tpu.memory_space<vmem>>, %arg6: memref<8x32xf32, #tpu.memory_space<vmem>>) attributes {dimension_semantics = [#tpu.dimension_semantics<parallel>], iteration_bounds = array<i64: 2>, scalar_prefetch = 0 : i64, scratch_operands = 0 : i64, tpu.core_type = #tpu.core_type<tc>, window_params = [{transform_indices = @transform_0, window_bounds = array<i64: 8, 32>}, {pipeline_mode = #tpu.pipeline_mode<synchronous>, transform_indices = @transform_1, window_bounds = array<i64: 32, 128>}, {pipeline_mode = #tpu.pipeline_mode<synchronous>, transform_indices = @transform_2, window_bounds = array<i64: 1, 128>}, {pipeline_mode = #tpu.pipeline_mode<synchronous>, transform_indices = @transform_3, window_bounds = array<i64: 128, 32>}, {pipeline_mode = #tpu.pipeline_mode<synchronous>, transform_indices = @transform_4, window_bounds = array<i64: 1, 32>}, {transform_indices = @transform_5, window_bounds = array<i64: 8, 32>}]} {
    %c0 = arith.constant 0 : index
    %c0_0 = arith.constant 0 : index
    %0 = vector.load %arg1[%c0, %c0_0] : memref<8x32xf32, #tpu.memory_space<vmem>>, vector<8x32xf32>
    %1 = arith.truncf %0 : vector<8x32xf32> to vector<8x32xbf16>
    %c0_1 = arith.constant 0 : index
    %c0_2 = arith.constant 0 : index
    %2 = vector.load %arg2[%c0_1, %c0_2] : memref<32x128xbf16, #tpu.memory_space<vmem>>, vector<32x128xbf16>
    %cst = arith.constant dense<0.000000e+00> : vector<8x128xf32>
    %3 = tpu.matmul %1, %2, %cst {dimension_numbers = #tpu.dot_dimension_numbers<[1], [0], [0], [1], [0, 0, 1, 1], [], []>} : vector<8x32xbf16>, vector<32x128xbf16>, vector<8x128xf32> -> vector<8x128xf32>
    %c0_3 = arith.constant 0 : index
    %c0_4 = arith.constant 0 : index
    %4 = vector.load %arg3[%c0_3, %c0_4] : memref<1x128xf32, #tpu.memory_space<vmem>>, vector<1x128xf32>
    %5 = vector.broadcast %4 : vector<1x128xf32> to vector<8x128xf32>
    %6 = arith.addf %3, %5 : vector<8x128xf32>
    %cst_5 = arith.constant 5.000000e-01 : f32
    %7 = vector.broadcast %cst_5 : f32 to vector<8x128xf32>
    %8 = arith.mulf %7, %6 : vector<8x128xf32>
    %9 = arith.mulf %6, %6 : vector<8x128xf32>
    %10 = arith.mulf %9, %6 : vector<8x128xf32>
    %cst_6 = arith.constant 4.471500e-02 : f32
    %11 = vector.broadcast %cst_6 : f32 to vector<8x128xf32>
    %12 = arith.mulf %11, %10 : vector<8x128xf32>
    %13 = arith.addf %6, %12 : vector<8x128xf32>
    %cst_7 = arith.constant 0.797884583 : f32
    %14 = vector.broadcast %cst_7 : f32 to vector<8x128xf32>
    %15 = arith.mulf %14, %13 : vector<8x128xf32>
    %16 = math.tanh %15 : vector<8x128xf32>
    %cst_8 = arith.constant 1.000000e+00 : f32
    %17 = vector.broadcast %cst_8 : f32 to vector<8x128xf32>
    %18 = arith.addf %17, %16 : vector<8x128xf32>
    %19 = arith.mulf %8, %18 : vector<8x128xf32>
    %20 = arith.truncf %19 : vector<8x128xf32> to vector<8x128xbf16>
    %c0_9 = arith.constant 0 : index
    %c0_10 = arith.constant 0 : index
    %21 = vector.load %arg4[%c0_9, %c0_10] : memref<128x32xbf16, #tpu.memory_space<vmem>>, vector<128x32xbf16>
    %cst_11 = arith.constant dense<0.000000e+00> : vector<8x32xf32>
    %22 = tpu.matmul %20, %21, %cst_11 {dimension_numbers = #tpu.dot_dimension_numbers<[1], [0], [0], [1], [0, 0, 1, 1], [], []>} : vector<8x128xbf16>, vector<128x32xbf16>, vector<8x32xf32> -> vector<8x32xf32>
    %c0_12 = arith.constant 0 : index
    %c0_13 = arith.constant 0 : index
    %23 = vector.load %arg5[%c0_12, %c0_13] : memref<1x32xf32, #tpu.memory_space<vmem>>, vector<1x32xf32>
    %24 = vector.broadcast %23 : vector<1x32xf32> to vector<8x32xf32>
    %25 = arith.addf %22, %24 : vector<8x32xf32>
    %c0_14 = arith.constant 0 : index
    %c0_15 = arith.constant 0 : index
    %26 = vector.load %arg6[%c0_14, %c0_15] : memref<8x32xf32, #tpu.memory_space<vmem>>, vector<8x32xf32>
    tpu.vector_store %arg6[%c0_14, %c0_15], %25 {strides = array<i32>} : memref<8x32xf32, #tpu.memory_space<vmem>>, vector<8x32xf32>,
    return
  }
  func.func @transform_0(%arg0: i32) -> (i32, i32) {
    %c0_i32 = arith.constant 0 : i32
    %c0_i32_0 = arith.constant 0 : i32
    return %arg0, %c0_i32 : i32, i32
  }
  func.func @transform_1(%arg0: i32) -> (i32, i32) {
    %c0_i32 = arith.constant 0 : i32
    %c0_i32_0 = arith.constant 0 : i32
    %c0_i32_1 = arith.constant 0 : i32
    return %c0_i32, %c0_i32_0 : i32, i32
  }
  func.func @transform_2(%arg0: i32) -> (i32, i32) {
    %c0_i32 = arith.constant 0 : i32
    %c0_i32_0 = arith.constant 0 : i32
    %c0_i32_1 = arith.constant 0 : i32
    return %c0_i32, %c0_i32_0 : i32, i32
  }
  func.func @transform_3(%arg0: i32) -> (i32, i32) {
    %c0_i32 = arith.constant 0 : i32
    %c0_i32_0 = arith.constant 0 : i32
    %c0_i32_1 = arith.constant 0 : i32
    return %c0_i32, %c0_i32_0 : i32, i32
  }
  func.func @transform_4(%arg0: i32) -> (i32, i32) {
    %c0_i32 = arith.constant 0 : i32
    %c0_i32_0 = arith.constant 0 : i32
    %c0_i32_1 = arith.constant 0 : i32
    return %c0_i32, %c0_i32_0 : i32, i32
  }
  func.func @transform_5(%arg0: i32) -> (i32, i32) {
    %c0_i32 = arith.constant 0 : i32
    %c0_i32_0 = arith.constant 0 : i32
    return %arg0, %c0_i32 : i32, i32
  }
}

</mosaic_0001>

<llo_original>
// kernel: tpu_custom_call.1
$region0: #{tpu_custom_call.1}
  #allocation0 [shape = 'u32[]', space=smem, size = 0x4, offset = 0x4, fixed_abs, tag = 'smem constant byte address 0x4 - core index']
  #allocation1 [shape = 'u32[72,128]{1,0:T(1,128)}', space=vmem, size = 0x9000, scoped, tag = 'internal scratch']
  %s0 = inlined_call_operand.vmem [shape: f32[16,32], index: 0, kind: input, shape index: {}]
  %s1 = inlined_call_operand.vmem [shape: bf16[32,128], index: 1, kind: input, shape index: {}]
  %s2 = inlined_call_operand.vmem [shape: f32[1,128], index: 2, kind: input, shape index: {}]
  %s3 = inlined_call_operand.vmem [shape: bf16[128,32], index: 3, kind: input, shape index: {}]
  %s4 = inlined_call_operand.vmem [shape: f32[1,32], index: 4, kind: input, shape index: {}]
  %s5 = inlined_call_operand.hbm [shape: f32[16,32], index: 5, kind: output, shape index: {}]
  %s6 = sld [smem:[#allocation0]]
  $region53: #{tpu_custom_call.1} parent=0
    _
  %s8 = ssub.s32 1, %s6
  %s9 = scalar_select 0, %s8, %s6
  $region1: #{tpu_custom_call.1} parent=0
    #allocation2 [shape = 'u8[8192]{0}', space=vmem, size = 0x2000, scoped, tag = 'output window, operand 0']
    #allocation3 [shape = 's32[2]{0}', space=sflag, size = 0x8, scoped, tag = 'scoped memory for tpu_custom_call.1']
    %10 = vsyncpa [#allocation3], 0
    %s11 = scalar_lea.sflag [#allocation3], 1
    %12 = vsyncpa %s11, 0
    loop: start=0, step=1, limit=4
    $region2: #{tpu_custom_call.1} parent=1 // loop_pre_header
      _
    $region3: #{tpu_custom_call.1} parent=1 // loop_header
      %s14 = sphi 0, %s18
      %p15 = scmp.ge.s32.totalorder %s14, 4
      %s24 = sphi 0, %s26
      %s27 = sphi 0, %s24
      %s28 = sphi 0, %s27
      %s44 = sphi 0, %s28
      %s48 = sphi 0, %s48
      %s50 = sphi 0, %s48
      %s51 = sphi 0, %s50
      %s65 = sphi 0, %s51
      %s69 = sphi 0, %s69
      %s71 = sphi 0, %s69
      %s72 = sphi 0, %s71
      %s86 = sphi 0, %s72
      %s90 = sphi 0, %s90
      %s92 = sphi 0, %s90
      %s93 = sphi 0, %s92
      %s107 = sphi 0, %s93
      %s111 = sphi 0, %s111
      %s113 = sphi 0, %s111
      %s114 = sphi 0, %s113
      %s128 = sphi 0, %s114
      %s134 = sphi 0, %s136
      %s137 = sphi 0, %s134
      %s138 = sphi 0, %s137
      %s154 = sphi 0, %s138
    $region4: #{tpu_custom_call.1} parent=1 // loop_header_branch
      %17 = sbr.rel (%p15) target = $region8
    $region5: #{tpu_custom_call.1} parent=1 // loop_body
      %s19 = ssub.s32 %s14, 1
      %s20 = ssub.s32 %s14, 2
      %s21 = sadd.s32 %s14, 1
      %s22 = ssub.s32 %s14, %s21
      %p23 = scmp.eq.s32.totalorder %s22, 0
      %s25 = sadd.s32 %s24, 1
      %s26 = scalar_select %p23, %s24, %s25
      %p29 = pneg %p23
      %p30 = scmp.eq.s32.totalorder %s14, 1
      %p31 = por %p29, %p30
      %p32 = scmp.ne.s32.totalorder %s24, %s27
      %p33 = scmp.eq.s32.totalorder %s14, 0
      %p34 = por %p32, %p33
      %p35 = scmp.ne.s32.totalorder %s24, %s27
      %p36 = scmp.eq.s32.totalorder %s19, 1
      %p37 = por %p35, %p36
      %p38 = scmp.ne.s32.totalorder %s27, %s28
      %p39 = scmp.eq.s32.totalorder %s19, 0
      %p40 = por %p38, %p39
      %p41 = scmp.ne.s32.totalorder %s27, %s28
      %p42 = scmp.eq.s32.totalorder %s20, 1
      %p43 = por %p41, %p42
      %p45 = scmp.ne.s32.totalorder %s28, %s44
      %p46 = scmp.eq.s32.totalorder %s20, 0
      %p47 = por %p45, %p46
      %s49 = sadd.s32 %s48, 1
      %p52 = scmp.eq.s32.totalorder %s14, 1
      %p53 = scmp.ne.s32.totalorder %s48, %s50
      %p54 = scmp.eq.s32.totalorder %s14, 0
      %p55 = por %p53, %p54
      %p56 = scmp.ne.s32.totalorder %s48, %s50
      %p57 = scmp.eq.s32.totalorder %s19, 1
      %p58 = por %p56, %p57
      %p59 = scmp.ne.s32.totalorder %s50, %s51
      %p60 = scmp.eq.s32.totalorder %s19, 0
      %p61 = por %p59, %p60
      %p62 = scmp.ne.s32.totalorder %s50, %s51
      %p63 = scmp.eq.s32.totalorder %s20, 1
      %p64 = por %p62, %p63
      %p66 = scmp.ne.s32.totalorder %s51, %s65
      %p67 = scmp.eq.s32.totalorder %s20, 0
      %p68 = por %p66, %p67
      %s70 = sadd.s32 %s69, 1
      %p73 = scmp.eq.s32.totalorder %s14, 1
      %p74 = scmp.ne.s32.totalorder %s69, %s71
      %p75 = scmp.eq.s32.totalorder %s14, 0
      %p76 = por %p74, %p75
      %p77 = scmp.ne.s32.totalorder %s69, %s71
      %p78 = scmp.eq.s32.totalorder %s19, 1
      %p79 = por %p77, %p78
      %p80 = scmp.ne.s32.totalorder %s71, %s72
      %p81 = scmp.eq.s32.totalorder %s19, 0
      %p82 = por %p80, %p81
      %p83 = scmp.ne.s32.totalorder %s71, %s72
      %p84 = scmp.eq.s32.totalorder %s20, 1
      %p85 = por %p83, %p84
      %p87 = scmp.ne.s32.totalorder %s72, %s86
      %p88 = scmp.eq.s32.totalorder %s20, 0
      %p89 = por %p87, %p88
      %s91 = sadd.s32 %s90, 1
      %p94 = scmp.eq.s32.totalorder %s14, 1
      %p95 = scmp.ne.s32.totalorder %s90, %s92
      %p96 = scmp.eq.s32.totalorder %s14, 0
      %p97 = por %p95, %p96
      %p98 = scmp.ne.s32.totalorder %s90, %s92
      %p99 = scmp.eq.s32.totalorder %s19, 1
      %p100 = por %p98, %p99
      %p101 = scmp.ne.s32.totalorder %s92, %s93
      %p102 = scmp.eq.s32.totalorder %s19, 0
      %p103 = por %p101, %p102
      %p104 = scmp.ne.s32.totalorder %s92, %s93
      %p105 = scmp.eq.s32.totalorder %s20, 1
      %p106 = por %p104, %p105
      %p108 = scmp.ne.s32.totalorder %s93, %s107
      %p109 = scmp.eq.s32.totalorder %s20, 0
      %p110 = por %p108, %p109
      %s112 = sadd.s32 %s111, 1
      %p115 = scmp.eq.s32.totalorder %s14, 1
      %p116 = scmp.ne.s32.totalorder %s111, %s113
      %p117 = scmp.eq.s32.totalorder %s14, 0
      %p118 = por %p116, %p117
      %p119 = scmp.ne.s32.totalorder %s111, %s113
      %p120 = scmp.eq.s32.totalorder %s19, 1
      %p121 = por %p119, %p120
      %p122 = scmp.ne.s32.totalorder %s113, %s114
      %p123 = scmp.eq.s32.totalorder %s19, 0
      %p124 = por %p122, %p123
      %p125 = scmp.ne.s32.totalorder %s113, %s114
      %p126 = scmp.eq.s32.totalorder %s20, 1
      %p127 = por %p125, %p126
      %p129 = scmp.ne.s32.totalorder %s114, %s128
      %p130 = scmp.eq.s32.totalorder %s20, 0
      %p131 = por %p129, %p130
      %s132 = ssub.s32 %s14, %s21
      %p133 = scmp.eq.s32.totalorder %s132, 0
      %s135 = sadd.s32 %s134, 1
      %s136 = scalar_select %p133, %s134, %s135
      %p139 = pneg %p133
      %p140 = scmp.eq.s32.totalorder %s14, 1
      %p141 = por %p139, %p140
      %p142 = scmp.ne.s32.totalorder %s134, %s137
      %p143 = scmp.eq.s32.totalorder %s14, 0
      %p144 = por %p142, %p143
      %p145 = scmp.ne.s32.totalorder %s134, %s137
      %p146 = scmp.eq.s32.totalorder %s19, 1
      %p147 = por %p145, %p146
      %p148 = scmp.ne.s32.totalorder %s137, %s138
      %p149 = scmp.eq.s32.totalorder %s19, 0
      %p150 = por %p148, %p149
      %p151 = scmp.ne.s32.totalorder %s137, %s138
      %p152 = scmp.eq.s32.totalorder %s20, 1
      %p153 = por %p151, %p152
      %p155 = scmp.ne.s32.totalorder %s138, %s154
      %p156 = scmp.eq.s32.totalorder %s20, 0
      %p157 = por %p155, %p156
      %p158 = scmp.le.s32.totalorder 1, %s14
      %p159 = scmp.lt.s32.totalorder %s14, 3
      %p160 = pnand %p158, %p159
      %p161 = pneg %p160
      // Predicated region
      $region9: #{tpu_custom_call.1} parent=5 // pred_check
        _
      $region10: #{tpu_custom_call.1} parent=5 // pred_check_branch
        %163 = sbr.rel (%p160) target = $region12
      $region11: #{tpu_custom_call.1} parent=5 // pred_region
        %s164 = ssub.s32 %s14, 1
        // Predicated region
        $region13: #{tpu_custom_call.1} parent=11 // pred_check
          %p165 = pneg %p61
        $region14: #{tpu_custom_call.1} parent=11 // pred_check_branch
          %167 = sbr.rel (%p165) target = $region16
        $region15: #{tpu_custom_call.1} parent=11 // pred_region
          _
        $region16: #{tpu_custom_call.1} parent=11 // pred_fallthru
          _
        // Predicated region
        $region17: #{tpu_custom_call.1} parent=11 // pred_check
          %p168 = pneg %p82
        $region18: #{tpu_custom_call.1} parent=11 // pred_check_branch
          %170 = sbr.rel (%p168) target = $region20
        $region19: #{tpu_custom_call.1} parent=11 // pred_region
          _
        $region20: #{tpu_custom_call.1} parent=11 // pred_fallthru
          _
        // Predicated region
        $region21: #{tpu_custom_call.1} parent=11 // pred_check
          %p171 = pneg %p103
        $region22: #{tpu_custom_call.1} parent=11 // pred_check_branch
          %173 = sbr.rel (%p171) target = $region24
        $region23: #{tpu_custom_call.1} parent=11 // pred_region
          _
        $region24: #{tpu_custom_call.1} parent=11 // pred_fallthru
          _
        // Predicated region
        $region25: #{tpu_custom_call.1} parent=11 // pred_check
          %p174 = pneg %p124
        $region26: #{tpu_custom_call.1} parent=11 // pred_check_branch
          %176 = sbr.rel (%p174) target = $region28
        $region27: #{tpu_custom_call.1} parent=11 // pred_region
          _
        $region28: #{tpu_custom_call.1} parent=11 // pred_fallthru
          _
      $region12: #{tpu_custom_call.1} parent=5 // pred_fallthru
        _
      %p177 = scmp.lt.s32.totalorder %s14, 2
      // Predicated region
      $region29: #{tpu_custom_call.1} parent=5 // pred_check
        %p178 = pneg %p177
      $region30: #{tpu_custom_call.1} parent=5 // pred_check_branch
        %180 = sbr.rel (%p178) target = $region32
      $region31: #{tpu_custom_call.1} parent=5 // pred_region
        // Predicated region
        $region33: #{tpu_custom_call.1} parent=31 // pred_check
          %p181 = pneg %p34
        $region34: #{tpu_custom_call.1} parent=31 // pred_check_branch
          %183 = sbr.rel (%p181) target = $region36
        $region35: #{tpu_custom_call.1} parent=31 // pred_region
          %p184 = scmp.lt.s32.totalorder %s14, 1
          %s185 = scalar_select %p184, %s14, 1
          %s186 = smul.addr %s185, 8
          %s187 = scalar_lea.vmem %s0, %s186
        $region36: #{tpu_custom_call.1} parent=31 // pred_fallthru
          _
      $region32: #{tpu_custom_call.1} parent=5 // pred_fallthru
        _
      %p188 = scmp.le.s32.totalorder 1, %s14
      %p189 = scmp.lt.s32.totalorder %s14, 3
      %p190 = pnand %p188, %p189
      %p191 = pneg %p190
      // Predicated region
      $region37: #{tpu_custom_call.1} parent=5 // pred_check
        _
      $region38: #{tpu_custom_call.1} parent=5 // pred_check_branch
        %193 = sbr.rel (%p190) target = $region40
      $region39: #{tpu_custom_call.1} parent=5 // pred_region
        %s194 = ssub.s32 %s14, 1
        %p195 = scmp.lt.s32.totalorder %s19, 1
        %s196 = scalar_select %p195, %s19, 1
        %s197 = smul.addr %s196, 8
        %s198 = scalar_lea.vmem %s0, %s197
        %p199 = pneg %p40
        %p200 = pneg %p37
        %p201 = pneg %p61
        %p202 = pneg %p58
        %p203 = pneg %p82
        %p204 = pneg %p79
        %p205 = pneg %p103
        %p206 = pneg %p100
        %p207 = pneg %p124
        %p208 = pneg %p121
        %p209 = pneg %p150
        %p210 = pneg %p147
        %s211 = sand.u32 %s137, 1
        %s212 = scalar_lea.sflag [#allocation3], %s211
        %s213 = sand.u32 %s137, 1
        %s214 = smul.addr %s213, 8
        %s215 = scalar_lea.vmem [#allocation2], %s214
        %p216 = scmp.lt.s32.totalorder %s19, 1
        %s217 = scalar_select %p216, %s19, 1
        %s218 = smul.addr %s217, 8
        %s219 = scalar_lea.vmem %s0, %s218
        %v221 = vld [vmem:[%s219] sm:$0xff]
        %v222 = vpack.c.bf16 %v221, %v221
        %v223 = vld [vmem:[%s1] sm:$0xf]
        %v224 = vld [vmem:[%s1 + $0x4] sm:$0xf]
        %v225 = vld [vmem:[%s1 + $0x8] sm:$0xf]
        %v226 = vld [vmem:[%s1 + $0xc] sm:$0xf]
        %v227 = vld [vmem:[%s2] sm:$0x1]
        %v229 = vperm.slane %v227, 0
        %v235 = vunpack.c.l.b16 %v223
        %v236 = vunpack.c.l.b16 %v224
        %v237 = vunpack.c.l.b16 %v225
        %v238 = vunpack.c.l.b16 %v226
        %v239 = vpack.c.b16 %v236, %v235
        %v240 = vpack.c.b16 %v238, %v237
        %vm243 = vcmask 261120
        %v245 = vsel %vm243, %v222, 0
        %247 = vmatpush.bf16.msra.mxu0 0
        %248 = vmatpush.bf16.msra.mxu0 0
        %249 = vmatpush.bf16.msra.mxu0 0
        %250 = vmatpush.bf16.msra.mxu0 0
        %251 = vmatpush.bf16.msra.mxu0 0
        %252 = vmatpush.bf16.msra.mxu0 0
        %253 = vmatpush.bf16.msra.mxu0 %v240
        %254 = vmatpush.bf16.msra.mxu0 %v239
        %255 = vmatmul.bf16.gmra.mxu0 %v245
        %v256 = vpop.f32.mrf.mxu0
        %v257 = vadd.f32 %v229, %v256
        %v258 = vpop.f32.mrf.mxu0
        %259 = vdwg.mxu0
        %v260 = vmul.f32 %v257, 0.5
        %v261 = vmul.f32 %v257, %v257
        %v262 = vmul.f32 %v261, %v257
        %v263 = vmul.f32 %v262, 0.044715
        %v264 = vadd.f32 %v257, %v263
        %v265 = vmul.f32 %v264, 0.7978846
        %v266 = vtanh.pop %v265
        %v267 = vadd.f32 %v266, 1.0
        %v268 = vmul.f32 %v260, %v267
        %v269 = vpack.c.bf16 %v268, %v268
        %v270 = vld [vmem:[%s3] sm:$0xf]
        %v271 = vld [vmem:[%s3 + $0x4] sm:$0xf]
        %v272 = vld [vmem:[%s3 + $0x8] sm:$0xf]
        %v273 = vld [vmem:[%s3 + $0xc] sm:$0xf]
        %v274 = vld [vmem:[%s3 + $0x10] sm:$0xf]
        %v275 = vld [vmem:[%s3 + $0x14] sm:$0xf]
        %v276 = vld [vmem:[%s3 + $0x18] sm:$0xf]
        %v277 = vld [vmem:[%s3 + $0x1c] sm:$0xf]
        %v278 = vld [vmem:[%s3 + $0x20] sm:$0xf]
        %v279 = vld [vmem:[%s3 + $0x24] sm:$0xf]
        %v280 = vld [vmem:[%s3 + $0x28] sm:$0xf]
        %v281 = vld [vmem:[%s3 + $0x2c] sm:$0xf]
        %v282 = vld [vmem:[%s3 + $0x30] sm:$0xf]
        %v283 = vld [vmem:[%s3 + $0x34] sm:$0xf]
        %v284 = vld [vmem:[%s3 + $0x38] sm:$0xf]
        %v285 = vld [vmem:[%s3 + $0x3c] sm:$0xf]
        %v286 = vld [vmem:[%s4] sm:$0x1]
        %v288 = vperm.slane %v286, 0
        %v306 = vunpack.c.l.b16 %v270
        %v307 = vunpack.c.l.b16 %v271
        %v308 = vunpack.c.l.b16 %v272
        %v309 = vunpack.c.l.b16 %v273
        %v310 = vunpack.c.l.b16 %v274
        %v311 = vunpack.c.l.b16 %v275
        %v312 = vunpack.c.l.b16 %v276
        %v313 = vunpack.c.l.b16 %v277
        %v314 = vunpack.c.l.b16 %v278
        %v315 = vunpack.c.l.b16 %v279
        %v316 = vunpack.c.l.b16 %v280
        %v317 = vunpack.c.l.b16 %v281
        %v318 = vunpack.c.l.b16 %v282
        %v319 = vunpack.c.l.b16 %v283
        %v320 = vunpack.c.l.b16 %v284
        %v321 = vunpack.c.l.b16 %v285
        %v322 = vpack.c.b16 %v307, %v306
        %v323 = vpack.c.b16 %v309, %v308
        %v324 = vpack.c.b16 %v311, %v310
        %v325 = vpack.c.b16 %v313, %v312
        %v326 = vpack.c.b16 %v315, %v314
        %v327 = vpack.c.b16 %v317, %v316
        %v328 = vpack.c.b16 %v319, %v318
        %v329 = vpack.c.b16 %v321, %v320
        %338 = vmatpush.bf16.msra.mxu0 %v329
        %339 = vmatpush.bf16.msra.mxu0 %v328
        %340 = vmatpush.bf16.msra.mxu0 %v327
        %341 = vmatpush.bf16.msra.mxu0 %v326
        %342 = vmatpush.bf16.msra.mxu0 %v325
        %343 = vmatpush.bf16.msra.mxu0 %v324
        %344 = vmatpush.bf16.msra.mxu0 %v323
        %345 = vmatpush.bf16.msra.mxu0 %v322
        %346 = vmatmul.bf16.gmra.mxu0 %v269
        %v347 = vpop.f32.mrf.mxu0
        %v348 = vadd.f32 %v288, %v347
        %v349 = vpop.f32.mrf.mxu0
        %350 = vdwg.mxu0
        %351 = vst.msk [vmem:[%s215] sm:$0xff] %vm243, %v348
        %s352 = sand.u32 %s137, 1
        %s353 = scalar_lea.sflag [#allocation3], %s352
        %s354 = sand.u32 %s137, 1
        %s355 = smul.addr %s354, 8
        %s356 = scalar_lea.vmem [#allocation2], %s355
        // Predicated region
        $region41: #{tpu_custom_call.1} parent=39 // pred_check
          %p357 = pneg %p147
        $region42: #{tpu_custom_call.1} parent=39 // pred_check_branch
          %359 = sbr.rel (%p357) target = $region44
        $region43: #{tpu_custom_call.1} parent=39 // pred_region
          %361 = vsyncadd %s353, 0
          %s362 = smul.addr %s19, 8
          %s363 = scalar_lea.hbm %s5, %s362
          %s365 = sshll.u32 %s356, 4
          %s366 = int_to_ptr.vmem [resolvable:$true] %s365
          %s367 = sshll.u32 %s363, 4
          %s368 = int_to_ptr.hbm [resolvable:$true] %s367
          %370 = dma.vmem_to_hbm [thread:$0]  %s366, 128, %s368, %s353
        $region44: #{tpu_custom_call.1} parent=39 // pred_fallthru
          _
      $region40: #{tpu_custom_call.1} parent=5 // pred_fallthru
        _
      %p371 = scmp.le.s32.totalorder 2, %s14
      // Predicated region
      $region45: #{tpu_custom_call.1} parent=5 // pred_check
        %p372 = pneg %p371
      $region46: #{tpu_custom_call.1} parent=5 // pred_check_branch
        %374 = sbr.rel (%p372) target = $region48
      $region47: #{tpu_custom_call.1} parent=5 // pred_region
        %s375 = ssub.s32 %s14, 2
        // Predicated region
        $region49: #{tpu_custom_call.1} parent=47 // pred_check
          %p376 = pneg %p153
        $region50: #{tpu_custom_call.1} parent=47 // pred_check_branch
          %378 = sbr.rel (%p376) target = $region52
        $region51: #{tpu_custom_call.1} parent=47 // pred_region
          %s379 = sand.u32 %s138, 1
          %s380 = scalar_lea.sflag [#allocation3], %s379
          %s381 = sand.u32 %s138, 1
          %s382 = smul.addr %s381, 8
          %s383 = scalar_lea.vmem [#allocation2], %s382
          %385 = dma.done %s380, 128
        $region52: #{tpu_custom_call.1} parent=47 // pred_fallthru
          _
      $region48: #{tpu_custom_call.1} parent=5 // pred_fallthru
        _
    $region6: #{tpu_custom_call.1} parent=1 // loop_footer
      %s18 = sadd.s32 1, %s14
    $region7: #{tpu_custom_call.1} parent=1 // loop_footer_branch
      %13 = sbr.rel target = $region3
    $region8: #{tpu_custom_call.1} parent=1 // loop_exit
      _
    %386 = vsyncpa [#allocation3], 1
    %s387 = scalar_lea.sflag [#allocation3], 1
    %388 = vsyncpa %s387, 1

</llo_original>
